<compile_context>
chip_gen: v5e
topology: v5e:2x2
jax: 0.10.0
libtpu: 0.0.40
codegen_flags: <defaults>
</compile_context>

<pallas_src>
import functools

import jax
import jax.numpy as jnp
from jax.experimental import pallas as pl
from jax.experimental.pallas import tpu as pltpu


def _make_dense_kernel(x_ref, w_ref, b_ref, mask_ref, alpha_ref, o_ref, *, width, ks):
    """x_ref:    (1, C, H*W)        one sample, NCHW with spatial flattened onto lanes
       w_ref:    (G, ks*ks*C)       conv weight, columns ordered (kh, kw, c)
       b_ref:    (G, 1)             conv bias
       mask_ref: (ks, H*W)          per-kw validity mask (zeros where a tap crosses a row edge)
       alpha_ref:(1, 1)   SMEM      PReLU shared slope
       o_ref:    (1, C+G, H*W)      concatenated output [x ; prelu(conv(x))]
    """
    C, HW = x_ref.shape[1], x_ref.shape[2]
    P = ks // 2

    xv = x_ref[0]                                            # (C, H*W), loaded once
    # Fused zero padding in value space: P zero rows (P*width lanes) + P slack lanes
    # on each side so every tap is an in-bounds static lane slice.
    pad = jnp.zeros((C, P * width + P), xv.dtype)
    xfe = jnp.concatenate([pad, xv, pad], axis=1)            # (C, H*W + 2*(P*width + P))

    maskv = mask_ref[...]                                    # (ks, H*W), loaded once
    mask_rows = [maskv[kw:kw + 1, :] for kw in range(ks)]    # each (1, H*W)

    # Transposed im2col: 9 lane-shifted windows of the padded value, row-wrap columns zeroed.
    taps = []
    for kh in range(ks):
        for kw in range(ks):
            start = kh * width + kw                          # static lane offset
            t = xfe[:, start:start + HW]                     # (C, H*W)
            taps.append(t * mask_rows[kw])
    rhs = jnp.concatenate(taps, axis=0)                      # (ks*ks*C, H*W)

    # Channel mixing on the MXU, f32 accumulation.
    conv = jnp.dot(w_ref[...], rhs, preferred_element_type=jnp.float32)   # (G, H*W)
    conv = conv + b_ref[...]                                 # bias broadcast over lanes

    # PReLU with a single shared slope (nn.PReLU() default).
    alpha = alpha_ref[0, 0]
    conv = jnp.where(conv > 0, conv, alpha * conv)

    # torch.cat((x, out), dim=1): block concat along the (sublane) channel axis,
    # written as one full, lane-dense store.
    o_ref[0] = jnp.concatenate([xv, conv], axis=0)           # (C+G, H*W)


@jax.jit
def make_dense(x, w, b, alpha):
    """x: (N, C, H, W) NCHW; w: (G, C, ks, ks) PyTorch layout; b: (G,); alpha: scalar."""
    N, C, H, W = x.shape
    G, _, ks, _ = w.shape
    P = ks // 2
    HW = H * W

    x_flat = x.reshape(N, C, HW).astype(jnp.float32)                         # free reshape
    w2d = jnp.transpose(w, (0, 2, 3, 1)).reshape(G, ks * ks * C).astype(jnp.float32)
    b2 = b.reshape(G, 1).astype(jnp.float32)
    alpha2 = jnp.asarray(alpha, jnp.float32).reshape(1, 1)

    # Validity mask per kernel column kw: zero output columns whose tap would wrap
    # across an image-row boundary (these stand in for the width zero-padding).
    col = jnp.arange(HW, dtype=jnp.int32) % W
    edge_mask = jnp.stack(
        [((col >= (P - kw)) & (col < (W + P - kw))).astype(jnp.float32)
         for kw in range(ks)], axis=0)                                       # (ks, H*W)

    kernel = functools.partial(_make_dense_kernel, width=W, ks=ks)
    out_flat = pl.pallas_call(
        kernel,
        out_shape=jax.ShapeDtypeStruct((N, C + G, HW), jnp.float32),
        grid=(N,),
        in_specs=[
            pl.BlockSpec((1, C, HW), lambda n: (n, 0, 0)),                   # x (per sample)
            pl.BlockSpec((G, ks * ks * C), lambda n: (0, 0)),                # weight
            pl.BlockSpec((G, 1), lambda n: (0, 0)),                          # bias
            pl.BlockSpec((ks, HW), lambda n: (0, 0)),                        # edge masks
            pl.BlockSpec((1, 1), lambda n: (0, 0),
                         memory_space=pltpu.MemorySpace.SMEM),               # PReLU alpha
        ],
        out_specs=pl.BlockSpec((1, C + G, HW), lambda n: (n, 0, 0)),
        compiler_params=pltpu.CompilerParams(dimension_semantics=("parallel",)),
    )(x_flat, w2d, b2, edge_mask, alpha2)

    return out_flat.reshape(N, C + G, H, W)                                  # free reshape


if __name__ == "__main__":
    key = jax.random.PRNGKey(0)
    k1, k2, k3 = jax.random.split(key, 3)

    N, C, H, W = 2, 4, 16, 16      # nChannels = 4
    G, ks = 4, 3                   # growthRate = 4, kernel_size = 3

    x = jax.random.normal(k1, (N, C, H, W), jnp.float32)
    fan_in = C * ks * ks
    bound = 1.0 / (fan_in ** 0.5)
    w = jax.random.uniform(k2, (G, C, ks, ks), jnp.float32, -bound, bound)
    b = jax.random.uniform(k3, (G,), jnp.float32, -bound, bound)
    alpha = jnp.float32(0.25)      # nn.PReLU() default single shared parameter

    out = make_dense(x, w, b, alpha)
    out = jax.block_until_ready(out)

    # Pure-JAX reference of make_dense.forward for a silent sanity check.
    conv = jax.lax.conv_general_dilated(
        x, w, window_strides=(1, 1), padding=[(ks // 2, ks // 2), (ks // 2, ks // 2)],
        dimension_numbers=("NCHW", "OIHW", "NCHW")) + b.reshape(1, G, 1, 1)
    act = jnp.where(conv > 0, conv, alpha * conv)
    ref = jnp.concatenate([x, act], axis=1)

    assert out.shape == (N, C + G, H, W), out.shape
    err = float(jnp.max(jnp.abs(out - ref)))
    assert jnp.allclose(out, ref, atol=1e-4, rtol=1e-4), err

    print("KERNEL_OK")
</pallas_src>

<mosaic_0001>
module attributes {stable_mosaic.version = 11 : i64} {
  func.func @_make_dense_kernel(%arg0: i32, %arg1: memref<1x4x256xf32, #tpu.memory_space<vmem>>, %arg2: memref<4x36xf32, #tpu.memory_space<vmem>>, %arg3: memref<4x1xf32, #tpu.memory_space<vmem>>, %arg4: memref<3x256xf32, #tpu.memory_space<vmem>>, %arg5: memref<1x1xf32, #tpu.memory_space<smem>>, %arg6: memref<1x8x256xf32, #tpu.memory_space<vmem>>) attributes {dimension_semantics = [#tpu.dimension_semantics<parallel>], iteration_bounds = array<i64: 2>, scalar_prefetch = 0 : i64, scratch_operands = 0 : i64, tpu.core_type = #tpu.core_type<tc>, window_params = [{transform_indices = @transform_0, window_bounds = array<i64: 1, 4, 256>}, {pipeline_mode = #tpu.pipeline_mode<synchronous>, transform_indices = @transform_1, window_bounds = array<i64: 4, 36>}, {pipeline_mode = #tpu.pipeline_mode<synchronous>, transform_indices = @transform_2, window_bounds = array<i64: 4, 1>}, {pipeline_mode = #tpu.pipeline_mode<synchronous>, transform_indices = @transform_3, window_bounds = array<i64: 3, 256>}, {transform_indices = @transform_4, window_bounds = array<i64: 1, 1>}, {transform_indices = @transform_5, window_bounds = array<i64: 1, 8, 256>}]} {
    %c0 = arith.constant 0 : index
    %c0_0 = arith.constant 0 : index
    %c0_1 = arith.constant 0 : index
    %0 = vector.load %arg1[%c0, %c0_0, %c0_1] : memref<1x4x256xf32, #tpu.memory_space<vmem>>, vector<1x4x256xf32>
    %1 = vector.shape_cast %0 : vector<1x4x256xf32> to vector<4x256xf32>
    %cst = arith.constant 0.000000e+00 : f32
    %2 = vector.broadcast %cst : f32 to vector<4x17xf32>
    %3 = tpu.concatenate %2, %1, %2 in 1 : vector<4x17xf32>, vector<4x256xf32>, vector<4x17xf32> -> vector<4x290xf32>
    %c0_2 = arith.constant 0 : index
    %c0_3 = arith.constant 0 : index
    %4 = vector.load %arg4[%c0_2, %c0_3] : memref<3x256xf32, #tpu.memory_space<vmem>>, vector<3x256xf32>
    %5 = vector.extract_strided_slice %4 {offsets = [0, 0], sizes = [1, 256], strides = [1, 1]} : vector<3x256xf32> to vector<1x256xf32>
    %6 = vector.extract_strided_slice %4 {offsets = [1, 0], sizes = [1, 256], strides = [1, 1]} : vector<3x256xf32> to vector<1x256xf32>
    %7 = vector.extract_strided_slice %4 {offsets = [2, 0], sizes = [1, 256], strides = [1, 1]} : vector<3x256xf32> to vector<1x256xf32>
    %8 = vector.extract_strided_slice %3 {offsets = [0, 0], sizes = [4, 256], strides = [1, 1]} : vector<4x290xf32> to vector<4x256xf32>
    %9 = vector.broadcast %5 : vector<1x256xf32> to vector<4x256xf32>
    %10 = arith.mulf %8, %9 : vector<4x256xf32>
    %11 = vector.extract_strided_slice %3 {offsets = [0, 1], sizes = [4, 256], strides = [1, 1]} : vector<4x290xf32> to vector<4x256xf32>
    %12 = vector.broadcast %6 : vector<1x256xf32> to vector<4x256xf32>
    %13 = arith.mulf %11, %12 : vector<4x256xf32>
    %14 = vector.extract_strided_slice %3 {offsets = [0, 2], sizes = [4, 256], strides = [1, 1]} : vector<4x290xf32> to vector<4x256xf32>
    %15 = vector.broadcast %7 : vector<1x256xf32> to vector<4x256xf32>
    %16 = arith.mulf %14, %15 : vector<4x256xf32>
    %17 = vector.extract_strided_slice %3 {offsets = [0, 16], sizes = [4, 256], strides = [1, 1]} : vector<4x290xf32> to vector<4x256xf32>
    %18 = vector.broadcast %5 : vector<1x256xf32> to vector<4x256xf32>
    %19 = arith.mulf %17, %18 : vector<4x256xf32>
    %20 = vector.extract_strided_slice %3 {offsets = [0, 17], sizes = [4, 256], strides = [1, 1]} : vector<4x290xf32> to vector<4x256xf32>
    %21 = vector.broadcast %6 : vector<1x256xf32> to vector<4x256xf32>
    %22 = arith.mulf %20, %21 : vector<4x256xf32>
    %23 = vector.extract_strided_slice %3 {offsets = [0, 18], sizes = [4, 256], strides = [1, 1]} : vector<4x290xf32> to vector<4x256xf32>
    %24 = vector.broadcast %7 : vector<1x256xf32> to vector<4x256xf32>
    %25 = arith.mulf %23, %24 : vector<4x256xf32>
    %26 = vector.extract_strided_slice %3 {offsets = [0, 32], sizes = [4, 256], strides = [1, 1]} : vector<4x290xf32> to vector<4x256xf32>
    %27 = vector.broadcast %5 : vector<1x256xf32> to vector<4x256xf32>
    %28 = arith.mulf %26, %27 : vector<4x256xf32>
    %29 = vector.extract_strided_slice %3 {offsets = [0, 33], sizes = [4, 256], strides = [1, 1]} : vector<4x290xf32> to vector<4x256xf32>
    %30 = vector.broadcast %6 : vector<1x256xf32> to vector<4x256xf32>
    %31 = arith.mulf %29, %30 : vector<4x256xf32>
    %32 = vector.extract_strided_slice %3 {offsets = [0, 34], sizes = [4, 256], strides = [1, 1]} : vector<4x290xf32> to vector<4x256xf32>
    %33 = vector.broadcast %7 : vector<1x256xf32> to vector<4x256xf32>
    %34 = arith.mulf %32, %33 : vector<4x256xf32>
    %35 = tpu.concatenate %10, %13, %16, %19, %22, %25, %28, %31, %34 in 0 : vector<4x256xf32>, vector<4x256xf32>, vector<4x256xf32>, vector<4x256xf32>, vector<4x256xf32>, vector<4x256xf32>, vector<4x256xf32>, vector<4x256xf32>, vector<4x256xf32> -> vector<36x256xf32>
    %c0_4 = arith.constant 0 : index
    %c0_5 = arith.constant 0 : index
    %36 = vector.load %arg2[%c0_4, %c0_5] : memref<4x36xf32, #tpu.memory_space<vmem>>, vector<4x36xf32>
    %cst_6 = arith.constant dense<0.000000e+00> : vector<4x256xf32>
    %37 = tpu.matmul %36, %35, %cst_6 {dimension_numbers = #tpu.dot_dimension_numbers<[1], [0], [0], [1], [0, 0, 1, 1], [], []>} : vector<4x36xf32>, vector<36x256xf32>, vector<4x256xf32> -> vector<4x256xf32>
    %c0_7 = arith.constant 0 : index
    %c0_8 = arith.constant 0 : index
    %38 = vector.load %arg3[%c0_7, %c0_8] : memref<4x1xf32, #tpu.memory_space<vmem>>, vector<4x1xf32>
    %39 = vector.broadcast %38 : vector<4x1xf32> to vector<4x256xf32>
    %40 = arith.addf %37, %39 : vector<4x256xf32>
    %c0_9 = arith.constant 0 : index
    %c0_10 = arith.constant 0 : index
    %41 = memref.load %arg5[%c0_9, %c0_10] : memref<1x1xf32, #tpu.memory_space<smem>>
    %cst_11 = arith.constant 0.000000e+00 : f32
    %42 = vector.broadcast %cst_11 : f32 to vector<4x256xf32>
    %43 = arith.cmpf ogt, %40, %42 : vector<4x256xf32>
    %44 = vector.broadcast %41 : f32 to vector<4x256xf32>
    %45 = arith.mulf %44, %40 : vector<4x256xf32>
    %46 = arith.select %43, %40, %45 : vector<4x256xi1>, vector<4x256xf32>
    %47 = tpu.concatenate %1, %46 in 0 : vector<4x256xf32>, vector<4x256xf32> -> vector<8x256xf32>
    %c0_12 = arith.constant 0 : index
    %c0_13 = arith.constant 0 : index
    %c0_14 = arith.constant 0 : index
    %48 = vector.load %arg6[%c0_12, %c0_13, %c0_14] : memref<1x8x256xf32, #tpu.memory_space<vmem>>, vector<1x8x256xf32>
    %49 = vector.shape_cast %48 : vector<1x8x256xf32> to vector<8x256xf32>
    %50 = vector.shape_cast %47 : vector<8x256xf32> to vector<1x8x256xf32>
    tpu.vector_store %arg6[%c0_12, %c0_13, %c0_14], %50 {strides = array<i32>} : memref<1x8x256xf32, #tpu.memory_space<vmem>>, vector<1x8x256xf32>,
    return
  }
  func.func @transform_0(%arg0: i32) -> (i32, i32, i32) {
    %c0_i32 = arith.constant 0 : i32
    %c0_i32_0 = arith.constant 0 : i32
    %c0_i32_1 = arith.constant 0 : i32
    return %arg0, %c0_i32, %c0_i32_0 : i32, i32, i32
  }
  func.func @transform_1(%arg0: i32) -> (i32, i32) {
    %c0_i32 = arith.constant 0 : i32
    %c0_i32_0 = arith.constant 0 : i32
    %c0_i32_1 = arith.constant 0 : i32
    return %c0_i32, %c0_i32_0 : i32, i32
  }
  func.func @transform_2(%arg0: i32) -> (i32, i32) {
    %c0_i32 = arith.constant 0 : i32
    %c0_i32_0 = arith.constant 0 : i32
    %c0_i32_1 = arith.constant 0 : i32
    return %c0_i32, %c0_i32_0 : i32, i32
  }
  func.func @transform_3(%arg0: i32) -> (i32, i32) {
    %c0_i32 = arith.constant 0 : i32
    %c0_i32_0 = arith.constant 0 : i32
    %c0_i32_1 = arith.constant 0 : i32
    return %c0_i32, %c0_i32_0 : i32, i32
  }
  func.func @transform_4(%arg0: i32) -> (i32, i32) {
    %c0_i32 = arith.constant 0 : i32
    %c0_i32_0 = arith.constant 0 : i32
    %c0_i32_1 = arith.constant 0 : i32
    return %c0_i32, %c0_i32_0 : i32, i32
  }
  func.func @transform_5(%arg0: i32) -> (i32, i32, i32) {
    %c0_i32 = arith.constant 0 : i32
    %c0_i32_0 = arith.constant 0 : i32
    %c0_i32_1 = arith.constant 0 : i32
    return %arg0, %c0_i32, %c0_i32_0 : i32, i32, i32
  }
}

</mosaic_0001>

<llo_original>
// kernel: make_dense.1
$region0: #{make_dense.1}
  #allocation0 [shape = 'u32[]', space=smem, size = 0x4, offset = 0x4, fixed_abs, tag = 'smem constant byte address 0x4 - core index']
  #allocation1 [shape = 'u32[72,128]{1,0:T(1,128)}', space=vmem, size = 0x9000, scoped, tag = 'internal scratch']
  #allocation2 [shape = 'f32[1,1]{1,0:T(1,128)S(6)}', space=smem, size = 0x200, scoped, tag = 'scoped memory for make_dense.1']
  %s0 = inlined_call_operand.vmem [shape: f32[2,4,256], index: 0, kind: input, shape index: {}]
  %s1 = inlined_call_operand.vmem [shape: f32[4,36], index: 1, kind: input, shape index: {}]
  %s2 = inlined_call_operand.vmem [shape: f32[4,1], index: 2, kind: input, shape index: {}]
  %s3 = inlined_call_operand.vmem [shape: f32[3,256], index: 3, kind: input, shape index: {}]
  %s4 = inlined_call_operand.<no memory space> [shape: f32[1,1], index: 4, kind: input, shape index: {}]
  %s5 = inlined_call_operand.vmem [shape: f32[2,8,256], index: 5, kind: output, shape index: {}]
  %s6 = sld [smem:[#allocation0]]
  $region53: #{make_dense.1} parent=0
    _
  %s8 = ssub.s32 1, %s6
  %s9 = scalar_select 0, %s8, %s6
  %10 = sst [smem:[#allocation2]] %s4
  loop: start=0, step=1, limit=4
  $region2: #{make_dense.1} parent=0 // loop_pre_header
    _
  $region3: #{make_dense.1} parent=0 // loop_header
    %s12 = sphi 0, %s16
    %p13 = scmp.ge.s32.totalorder %s12, 4
    %s22 = sphi 0, %s24
    %s25 = sphi 0, %s22
    %s26 = sphi 0, %s25
    %s42 = sphi 0, %s26
    %s46 = sphi 0, %s46
    %s48 = sphi 0, %s46
    %s49 = sphi 0, %s48
    %s63 = sphi 0, %s49
    %s67 = sphi 0, %s67
    %s69 = sphi 0, %s67
    %s70 = sphi 0, %s69
    %s84 = sphi 0, %s70
    %s88 = sphi 0, %s88
    %s90 = sphi 0, %s88
    %s91 = sphi 0, %s90
    %s105 = sphi 0, %s91
    %s109 = sphi 0, %s109
    %s111 = sphi 0, %s109
    %s112 = sphi 0, %s111
    %s126 = sphi 0, %s112
    %s132 = sphi 0, %s134
    %s135 = sphi 0, %s132
    %s136 = sphi 0, %s135
    %s152 = sphi 0, %s136
  $region4: #{make_dense.1} parent=0 // loop_header_branch
    %15 = sbr.rel (%p13) target = $region8
  $region5: #{make_dense.1} parent=0 // loop_body
    %s17 = ssub.s32 %s12, 1
    %s18 = ssub.s32 %s12, 2
    %s19 = sadd.s32 %s12, 1
    %s20 = ssub.s32 %s12, %s19
    %p21 = scmp.eq.s32.totalorder %s20, 0
    %s23 = sadd.s32 %s22, 1
    %s24 = scalar_select %p21, %s22, %s23
    %p27 = pneg %p21
    %p28 = scmp.eq.s32.totalorder %s12, 1
    %p29 = por %p27, %p28
    %p30 = scmp.ne.s32.totalorder %s22, %s25
    %p31 = scmp.eq.s32.totalorder %s12, 0
    %p32 = por %p30, %p31
    %p33 = scmp.ne.s32.totalorder %s22, %s25
    %p34 = scmp.eq.s32.totalorder %s17, 1
    %p35 = por %p33, %p34
    %p36 = scmp.ne.s32.totalorder %s25, %s26
    %p37 = scmp.eq.s32.totalorder %s17, 0
    %p38 = por %p36, %p37
    %p39 = scmp.ne.s32.totalorder %s25, %s26
    %p40 = scmp.eq.s32.totalorder %s18, 1
    %p41 = por %p39, %p40
    %p43 = scmp.ne.s32.totalorder %s26, %s42
    %p44 = scmp.eq.s32.totalorder %s18, 0
    %p45 = por %p43, %p44
    %s47 = sadd.s32 %s46, 1
    %p50 = scmp.eq.s32.totalorder %s12, 1
    %p51 = scmp.ne.s32.totalorder %s46, %s48
    %p52 = scmp.eq.s32.totalorder %s12, 0
    %p53 = por %p51, %p52
    %p54 = scmp.ne.s32.totalorder %s46, %s48
    %p55 = scmp.eq.s32.totalorder %s17, 1
    %p56 = por %p54, %p55
    %p57 = scmp.ne.s32.totalorder %s48, %s49
    %p58 = scmp.eq.s32.totalorder %s17, 0
    %p59 = por %p57, %p58
    %p60 = scmp.ne.s32.totalorder %s48, %s49
    %p61 = scmp.eq.s32.totalorder %s18, 1
    %p62 = por %p60, %p61
    %p64 = scmp.ne.s32.totalorder %s49, %s63
    %p65 = scmp.eq.s32.totalorder %s18, 0
    %p66 = por %p64, %p65
    %s68 = sadd.s32 %s67, 1
    %p71 = scmp.eq.s32.totalorder %s12, 1
    %p72 = scmp.ne.s32.totalorder %s67, %s69
    %p73 = scmp.eq.s32.totalorder %s12, 0
    %p74 = por %p72, %p73
    %p75 = scmp.ne.s32.totalorder %s67, %s69
    %p76 = scmp.eq.s32.totalorder %s17, 1
    %p77 = por %p75, %p76
    %p78 = scmp.ne.s32.totalorder %s69, %s70
    %p79 = scmp.eq.s32.totalorder %s17, 0
    %p80 = por %p78, %p79
    %p81 = scmp.ne.s32.totalorder %s69, %s70
    %p82 = scmp.eq.s32.totalorder %s18, 1
    %p83 = por %p81, %p82
    %p85 = scmp.ne.s32.totalorder %s70, %s84
    %p86 = scmp.eq.s32.totalorder %s18, 0
    %p87 = por %p85, %p86
    %s89 = sadd.s32 %s88, 1
    %p92 = scmp.eq.s32.totalorder %s12, 1
    %p93 = scmp.ne.s32.totalorder %s88, %s90
    %p94 = scmp.eq.s32.totalorder %s12, 0
    %p95 = por %p93, %p94
    %p96 = scmp.ne.s32.totalorder %s88, %s90
    %p97 = scmp.eq.s32.totalorder %s17, 1
    %p98 = por %p96, %p97
    %p99 = scmp.ne.s32.totalorder %s90, %s91
    %p100 = scmp.eq.s32.totalorder %s17, 0
    %p101 = por %p99, %p100
    %p102 = scmp.ne.s32.totalorder %s90, %s91
    %p103 = scmp.eq.s32.totalorder %s18, 1
    %p104 = por %p102, %p103
    %p106 = scmp.ne.s32.totalorder %s91, %s105
    %p107 = scmp.eq.s32.totalorder %s18, 0
    %p108 = por %p106, %p107
    %s110 = sadd.s32 %s109, 1
    %p113 = scmp.eq.s32.totalorder %s12, 1
    %p114 = scmp.ne.s32.totalorder %s109, %s111
    %p115 = scmp.eq.s32.totalorder %s12, 0
    %p116 = por %p114, %p115
    %p117 = scmp.ne.s32.totalorder %s109, %s111
    %p118 = scmp.eq.s32.totalorder %s17, 1
    %p119 = por %p117, %p118
    %p120 = scmp.ne.s32.totalorder %s111, %s112
    %p121 = scmp.eq.s32.totalorder %s17, 0
    %p122 = por %p120, %p121
    %p123 = scmp.ne.s32.totalorder %s111, %s112
    %p124 = scmp.eq.s32.totalorder %s18, 1
    %p125 = por %p123, %p124
    %p127 = scmp.ne.s32.totalorder %s112, %s126
    %p128 = scmp.eq.s32.totalorder %s18, 0
    %p129 = por %p127, %p128
    %s130 = ssub.s32 %s12, %s19
    %p131 = scmp.eq.s32.totalorder %s130, 0
    %s133 = sadd.s32 %s132, 1
    %s134 = scalar_select %p131, %s132, %s133
    %p137 = pneg %p131
    %p138 = scmp.eq.s32.totalorder %s12, 1
    %p139 = por %p137, %p138
    %p140 = scmp.ne.s32.totalorder %s132, %s135
    %p141 = scmp.eq.s32.totalorder %s12, 0
    %p142 = por %p140, %p141
    %p143 = scmp.ne.s32.totalorder %s132, %s135
    %p144 = scmp.eq.s32.totalorder %s17, 1
    %p145 = por %p143, %p144
    %p146 = scmp.ne.s32.totalorder %s135, %s136
    %p147 = scmp.eq.s32.totalorder %s17, 0
    %p148 = por %p146, %p147
    %p149 = scmp.ne.s32.totalorder %s135, %s136
    %p150 = scmp.eq.s32.totalorder %s18, 1
    %p151 = por %p149, %p150
    %p153 = scmp.ne.s32.totalorder %s136, %s152
    %p154 = scmp.eq.s32.totalorder %s18, 0
    %p155 = por %p153, %p154
    %p156 = scmp.le.s32.totalorder 1, %s12
    %p157 = scmp.lt.s32.totalorder %s12, 3
    %p158 = pnand %p156, %p157
    %p159 = pneg %p158
    // Predicated region
    $region9: #{make_dense.1} parent=5 // pred_check
      _
    $region10: #{make_dense.1} parent=5 // pred_check_branch
      %161 = sbr.rel (%p158) target = $region12
    $region11: #{make_dense.1} parent=5 // pred_region
      %s162 = ssub.s32 %s12, 1
      // Predicated region
      $region13: #{make_dense.1} parent=11 // pred_check
        %p163 = pneg %p59
      $region14: #{make_dense.1} parent=11 // pred_check_branch
        %165 = sbr.rel (%p163) target = $region16
      $region15: #{make_dense.1} parent=11 // pred_region
        _
      $region16: #{make_dense.1} parent=11 // pred_fallthru
        _
      // Predicated region
      $region17: #{make_dense.1} parent=11 // pred_check
        %p166 = pneg %p80
      $region18: #{make_dense.1} parent=11 // pred_check_branch
        %168 = sbr.rel (%p166) target = $region20
      $region19: #{make_dense.1} parent=11 // pred_region
        _
      $region20: #{make_dense.1} parent=11 // pred_fallthru
        _
      // Predicated region
      $region21: #{make_dense.1} parent=11 // pred_check
        %p169 = pneg %p101
      $region22: #{make_dense.1} parent=11 // pred_check_branch
        %171 = sbr.rel (%p169) target = $region24
      $region23: #{make_dense.1} parent=11 // pred_region
        _
      $region24: #{make_dense.1} parent=11 // pred_fallthru
        _
      // Predicated region
      $region25: #{make_dense.1} parent=11 // pred_check
        %p172 = pneg %p122
      $region26: #{make_dense.1} parent=11 // pred_check_branch
        %174 = sbr.rel (%p172) target = $region28
      $region27: #{make_dense.1} parent=11 // pred_region
        _
      $region28: #{make_dense.1} parent=11 // pred_fallthru
        _
    $region12: #{make_dense.1} parent=5 // pred_fallthru
      _
    %p175 = scmp.lt.s32.totalorder %s12, 2
    // Predicated region
    $region29: #{make_dense.1} parent=5 // pred_check
      %p176 = pneg %p175
    $region30: #{make_dense.1} parent=5 // pred_check_branch
      %178 = sbr.rel (%p176) target = $region32
    $region31: #{make_dense.1} parent=5 // pred_region
      // Predicated region
      $region33: #{make_dense.1} parent=31 // pred_check
        %p179 = pneg %p32
      $region34: #{make_dense.1} parent=31 // pred_check_branch
        %181 = sbr.rel (%p179) target = $region36
      $region35: #{make_dense.1} parent=31 // pred_region
        %p182 = scmp.lt.s32.totalorder %s12, 1
        %s183 = scalar_select %p182, %s12, 1
        %s184 = smul.addr %s183, 2
        %s185 = smul.addr %s184, 4
        %s186 = scalar_lea.vmem %s0, %s185
      $region36: #{make_dense.1} parent=31 // pred_fallthru
        _
    $region32: #{make_dense.1} parent=5 // pred_fallthru
      _
    %p187 = scmp.le.s32.totalorder 1, %s12
    %p188 = scmp.lt.s32.totalorder %s12, 3
    %p189 = pnand %p187, %p188
    %p190 = pneg %p189
    // Predicated region
    $region37: #{make_dense.1} parent=5 // pred_check
      _
    $region38: #{make_dense.1} parent=5 // pred_check_branch
      %192 = sbr.rel (%p189) target = $region40
    $region39: #{make_dense.1} parent=5 // pred_region
      %s193 = ssub.s32 %s12, 1
      %p194 = scmp.lt.s32.totalorder %s17, 1
      %s195 = scalar_select %p194, %s17, 1
      %s196 = smul.addr %s195, 2
      %s197 = smul.addr %s196, 4
      %s198 = scalar_lea.vmem %s0, %s197
      %p199 = pneg %p38
      %p200 = pneg %p35
      %p201 = pneg %p59
      %p202 = pneg %p56
      %p203 = pneg %p80
      %p204 = pneg %p77
      %p205 = pneg %p101
      %p206 = pneg %p98
      %p207 = pneg %p122
      %p208 = pneg %p119
      %p209 = pneg %p148
      %p210 = pneg %p145
      %p211 = scmp.lt.s32.totalorder %s17, 1
      %s212 = scalar_select %p211, %s17, 1
      %s213 = smul.addr %s212, 2
      %s214 = smul.addr %s213, 8
      %s215 = scalar_lea.vmem %s5, %s214
      %p216 = scmp.lt.s32.totalorder %s17, 1
      %s217 = scalar_select %p216, %s17, 1
      %s218 = smul.addr %s217, 2
      %s219 = smul.addr %s218, 4
      %s220 = scalar_lea.vmem %s0, %s219
      %p221 = scmp.lt.s32.totalorder %s17, 1
      %s222 = scalar_select %p221, %s17, 1
      %s223 = smul.addr %s222, 2
      %s224 = smul.addr %s223, 8
      %s225 = scalar_lea.vmem %s5, %s224
      %v226 = vld [vmem:[%s220] sm:$0xff]
      %228 = vst [vmem:[#allocation1] ss:$2 sm:$0xff] %v226
      %v229 = vld.sshfl [vmem:[#allocation1] sm:$0xff pattern:$0x75316420]
      %v230 = vld.sshfl [vmem:[#allocation1 + $0x8] sm:$0xff pattern:$0x75316420]
      %231 = vrot.lane.b32.xlu0 %v229, 17
      %v232 = vpop.permute.xlu0 %231
      %233 = vrot.lane.b32.xlu0 %v230, 17
      %v234 = vpop.permute.xlu0 %233
      %vm235 = vcmask 138240
      %v236 = vsel %vm235, %v232, %v234
      %v240 = vsel %vm235, 0.0, %v232
      %v241 = vsel %vm235, %v234, 0.0
      %v242 = vld [vmem:[%s3] sm:$0x77]
      %v244 = vperm.slane %v242, 0
      %v245 = vperm.slane %v242, 4
      %v248 = vperm.slane %v244, 0
      %v249 = vperm.slane %v245, 0
      %v250 = vmul.f32 %v240, %v248
      %v251 = vmul.f32 %v236, %v249
      %v252 = vperm.slane %v242, 1
      %v253 = vperm.slane %v242, 5
      %v256 = vperm.slane %v252, 1
      %v257 = vperm.slane %v253, 1
      %260 = vrot.lane.b32.xlu0 %v256, 1
      %v261 = vpop.permute.xlu0 %260
      %262 = vrot.lane.b32.xlu0 %v257, 1
      %v263 = vpop.permute.xlu0 %262
      %vm264 = vcmask 7168
      %v265 = vsel %vm264, %v261, %v263
      %v269 = vmul.f32 %v240, %v261
      %v270 = vmul.f32 %v236, %v265
      %v271 = vmul.f32 %v241, %v263
      %v272 = vperm.slane %v242, 2
      %v273 = vperm.slane %v242, 6
      %v276 = vperm.slane %v272, 2
      %v277 = vperm.slane %v273, 2
      %280 = vrot.lane.b32.xlu0 %v276, 2
      %v281 = vpop.permute.xlu0 %280
      %282 = vrot.lane.b32.xlu0 %v277, 2
      %v283 = vpop.permute.xlu0 %282
      %vm284 = vcmask 15360
      %v285 = vsel %vm284, %v281, %v283
      %v289 = vmul.f32 %v240, %v281
      %v290 = vmul.f32 %v236, %v285
      %v291 = vmul.f32 %v241, %v283
      %294 = vrot.lane.b32.xlu0 %v248, 16
      %v295 = vpop.permute.xlu0 %294
      %296 = vrot.lane.b32.xlu0 %v249, 16
      %v297 = vpop.permute.xlu0 %296
      %vm298 = vcmask 130048
      %v299 = vsel %vm298, %v295, %v297
      %v303 = vmul.f32 %v240, %v295
      %v304 = vmul.f32 %v236, %v299
      %v305 = vmul.f32 %v241, %v297
      %306 = vrot.lane.b32.xlu0 %v256, 17
      %v307 = vpop.permute.xlu0 %306
      %308 = vrot.lane.b32.xlu0 %v257, 17
      %v309 = vpop.permute.xlu0 %308
      %v310 = vsel %vm235, %v307, %v309
      %v314 = vmul.f32 %v240, %v307
      %v315 = vmul.f32 %v236, %v310
      %v316 = vmul.f32 %v241, %v309
      %317 = vrot.lane.b32.xlu0 %v276, 18
      %v318 = vpop.permute.xlu0 %317
      %319 = vrot.lane.b32.xlu0 %v277, 18
      %v320 = vpop.permute.xlu0 %319
      %vm321 = vcmask 146432
      %v322 = vsel %vm321, %v318, %v320
      %v326 = vmul.f32 %v240, %v318
      %v327 = vmul.f32 %v236, %v322
      %v328 = vmul.f32 %v241, %v320
      %329 = vrot.lane.b32.xlu0 %v248, 32
      %v330 = vpop.permute.xlu0 %329
      %331 = vrot.lane.b32.xlu0 %v249, 32
      %v332 = vpop.permute.xlu0 %331
      %vm333 = vcmask 261120
      %v334 = vsel %vm333, %v330, %v332
      %v338 = vmul.f32 %v240, %v330
      %v339 = vmul.f32 %v236, %v334
      %v340 = vmul.f32 %v241, %v332
      %341 = vrot.lane.b32.xlu0 %v256, 33
      %v342 = vpop.permute.xlu0 %341
      %343 = vrot.lane.b32.xlu0 %v257, 33
      %v344 = vpop.permute.xlu0 %343
      %vm345 = vcmask 269312
      %v346 = vsel %vm345, %v342, %v344
      %v350 = vmul.f32 %v240, %v342
      %v351 = vmul.f32 %v236, %v346
      %v352 = vmul.f32 %v241, %v344
      %353 = vrot.lane.b32.xlu0 %v276, 34
      %v354 = vpop.permute.xlu0 %353
      %355 = vrot.lane.b32.xlu0 %v277, 34
      %v356 = vpop.permute.xlu0 %355
      %vm357 = vcmask 277504
      %v358 = vsel %vm357, %v354, %v356
      %v362 = vmul.f32 %v240, %v354
      %v363 = vmul.f32 %v236, %v358
      %v364 = vmul.f32 %v241, %v356
      %v368 = vrot.slane %v269, 4
      %v369 = vrot.slane %v270, 4
      %v370 = vrot.slane %v271, 4
      %371 = vrot.lane.b32.xlu0 %v368, 127
      %v372 = vpop.permute.xlu0 %371
      %373 = vrot.lane.b32.xlu0 %v369, 127
      %v374 = vpop.permute.xlu0 %373
      %375 = vrot.lane.b32.xlu0 %v370, 127
      %v376 = vpop.permute.xlu0 %375
      %vm377 = vcmask 1039360
      %v378 = vsel %vm377, %v372, %v374
      %v379 = vsel %vm377, %v374, %v376
      %385 = vrot.lane.b32.xlu0 %v289, 126
      %v386 = vpop.permute.xlu0 %385
      %387 = vrot.lane.b32.xlu0 %v290, 126
      %v388 = vpop.permute.xlu0 %387
      %389 = vrot.lane.b32.xlu0 %v291, 126
      %v390 = vpop.permute.xlu0 %389
      %vm391 = vcmask 1031168
      %v392 = vsel %vm391, %v386, %v388
      %v393 = vsel %vm391, %v388, %v390
      %v399 = vrot.slane %v303, 4
      %v400 = vrot.slane %v304, 4
      %v401 = vrot.slane %v305, 4
      %402 = vrot.lane.b32.xlu0 %v399, 112
      %v403 = vpop.permute.xlu0 %402
      %404 = vrot.lane.b32.xlu0 %v400, 112
      %v405 = vpop.permute.xlu0 %404
      %406 = vrot.lane.b32.xlu0 %v401, 112
      %v407 = vpop.permute.xlu0 %406
      %vm408 = vcmask 916480
      %v409 = vsel %vm408, %v403, %v405
      %v410 = vsel %vm408, %v405, %v407
      %416 = vrot.lane.b32.xlu0 %v314, 111
      %v417 = vpop.permute.xlu0 %416
      %418 = vrot.lane.b32.xlu0 %v315, 111
      %v419 = vpop.permute.xlu0 %418
      %420 = vrot.lane.b32.xlu0 %v316, 111
      %v421 = vpop.permute.xlu0 %420
      %vm422 = vcmask 908288
      %v423 = vsel %vm422, %v417, %v419
      %v424 = vsel %vm422, %v419, %v421
      %v430 = vrot.slane %v326, 4
      %v431 = vrot.slane %v327, 4
      %v432 = vrot.slane %v328, 4
      %433 = vrot.lane.b32.xlu0 %v430, 110
      %v434 = vpop.permute.xlu0 %433
      %435 = vrot.lane.b32.xlu0 %v431, 110
      %v436 = vpop.permute.xlu0 %435
      %437 = vrot.lane.b32.xlu0 %v432, 110
      %v438 = vpop.permute.xlu0 %437
      %vm439 = vcmask 900096
      %v440 = vsel %vm439, %v434, %v436
      %v441 = vsel %vm439, %v436, %v438
      %447 = vrot.lane.b32.xlu0 %v338, 96
      %v448 = vpop.permute.xlu0 %447
      %449 = vrot.lane.b32.xlu0 %v339, 96
      %v450 = vpop.permute.xlu0 %449
      %451 = vrot.lane.b32.xlu0 %v340, 96
      %v452 = vpop.permute.xlu0 %451
      %vm453 = vcmask 785408
      %v454 = vsel %vm453, %v448, %v450
      %v455 = vsel %vm453, %v450, %v452
      %v461 = vrot.slane %v350, 4
      %v462 = vrot.slane %v351, 4
      %v463 = vrot.slane %v352, 4
      %464 = vrot.lane.b32.xlu0 %v461, 95
      %v465 = vpop.permute.xlu0 %464
      %466 = vrot.lane.b32.xlu0 %v462, 95
      %v467 = vpop.permute.xlu0 %466
      %468 = vrot.lane.b32.xlu0 %v463, 95
      %v469 = vpop.permute.xlu0 %468
      %vm470 = vcmask 777216
      %v471 = vsel %vm470, %v465, %v467
      %v472 = vsel %vm470, %v467, %v469
      %478 = vrot.lane.b32.xlu0 %v362, 94
      %v479 = vpop.permute.xlu0 %478
      %480 = vrot.lane.b32.xlu0 %v363, 94
      %v481 = vpop.permute.xlu0 %480
      %482 = vrot.lane.b32.xlu0 %v364, 94
      %v483 = vpop.permute.xlu0 %482
      %vm484 = vcmask 769024
      %v485 = vsel %vm484, %v479, %v481
      %v486 = vsel %vm484, %v481, %v483
      %vm487 = vcmask 1043456
      %v488 = vsel %vm487, %v250, %v378
      %v489 = vsel %vm487, %v251, %v379
      %v490 = vsel %vm487, %v392, %v409
      %v491 = vsel %vm487, %v393, %v410
      %v492 = vsel %vm487, %v423, %v440
      %v493 = vsel %vm487, %v424, %v441
      %v494 = vsel %vm487, %v454, %v471
      %v495 = vsel %vm487, %v455, %v472
      %v496 = vld [vmem:[%s1] sm:$0xf]
      %v497 = vld [vmem:[%s2] sm:$0xf]
      %499 = vset.pattern.permute.xlu0 0
      %500 = vperm.xlu0 %499, %v497
      %v501 = vpop.permute.xlu0 %500
      %vm503 = vcmask 293888
      %v505 = vsel %vm503, %v496, 0
      %v507 = vsel %vm487, %v485, 0
      %v509 = vsel %vm487, %v486, 0
      %511 = vmatpush.msra.mxu0 0.0
      %512 = vmatpush.msra.mxu0 0.0
      %513 = vmatpush.msra.mxu0 0.0
      %514 = vmatpush.msra.mxu0 0.0
      %515 = vmatpush.msra.mxu0 0.0
      %516 = vmatpush.msra.mxu0 0.0
      %517 = vmatpush.msra.mxu0 0.0
      %518 = vmatpush.msra.mxu0 0.0
      %519 = vmatpush.msra.mxu0 0.0
      %520 = vmatpush.msra.mxu0 0.0
      %521 = vmatpush.msra.mxu0 0.0
      %522 = vmatpush.msra.mxu0 %v507
      %523 = vmatpush.msra.mxu0 %v494
      %524 = vmatpush.msra.mxu0 %v492
      %525 = vmatpush.msra.mxu0 %v490
      %526 = vmatpush.msra.mxu0 %v488
      %527 = vmatmul.f32.gmra.mxu0 %v505
      %v528 = vpop.f32.mrf.mxu0
      %v529 = vadd.f32 %v501, %v528
      %530 = vdwg.mxu0
      %531 = vmatpush.msra.mxu0 0.0
      %532 = vmatpush.msra.mxu0 0.0
      %533 = vmatpush.msra.mxu0 0.0
      %534 = vmatpush.msra.mxu0 0.0
      %535 = vmatpush.msra.mxu0 0.0
      %536 = vmatpush.msra.mxu0 0.0
      %537 = vmatpush.msra.mxu0 0.0
      %538 = vmatpush.msra.mxu0 0.0
      %539 = vmatpush.msra.mxu0 0.0
      %540 = vmatpush.msra.mxu0 0.0
      %541 = vmatpush.msra.mxu0 0.0
      %542 = vmatpush.msra.mxu0 %v509
      %543 = vmatpush.msra.mxu0 %v495
      %544 = vmatpush.msra.mxu0 %v493
      %545 = vmatpush.msra.mxu0 %v491
      %546 = vmatpush.msra.mxu0 %v489
      %547 = vmatmul.f32.gmra.mxu0 %v505
      %v548 = vpop.f32.mrf.mxu0
      %v549 = vadd.f32 %v501, %v548
      %550 = vdwg.mxu0
      %s551 = sld [smem:[#allocation2]]
      %vm552 = vcmp.gt.f32.partialorder %v529, 0.0
      %vm553 = vcmp.gt.f32.partialorder %v549, 0.0
      %v554 = vstv %s551
      %v555 = vmul.f32 %v554, %v529
      %v556 = vmul.f32 %v554, %v549
      %v557 = vsel %vm552, %v529, %v555
      %v558 = vsel %vm553, %v549, %v556
      %559 = vst [vmem:[#allocation1] ss:$2 sm:$0xff] %v226
      %v560 = vld.sshfl [vmem:[#allocation1] sm:$0xff pattern:$0x75316420]
      %v561 = vld.sshfl [vmem:[#allocation1 + $0x8] sm:$0xff pattern:$0x75316420]
      %v566 = vrot.slane %v557, 4
      %v567 = vrot.slane %v558, 4
      %v570 = vsel %vm487, %v560, %v566
      %v571 = vsel %vm487, %v561, %v567
      %572 = vst [vmem:[%s225] sm:$0xff] %v570
      %573 = vst [vmem:[%s225 + $0x8] sm:$0xff] %v571
      %p574 = scmp.lt.s32.totalorder %s17, 1
      %s575 = scalar_select %p574, %s17, 1
      %s576 = smul.addr %s575, 2
      %s577 = smul.addr %s576, 8
      %s578 = scalar_lea.vmem %s5, %s577
      // Predicated region
      $region41: #{make_dense.1} parent=39 // pred_check
        %p579 = pneg %p145
      $region42: #{make_dense.1} parent=39 // pred_check_branch
        %581 = sbr.rel (%p579) target = $region44
      $region43: #{make_dense.1} parent=39 // pred_region
        _
      $region44: #{make_dense.1} parent=39 // pred_fallthru
        _
    $region40: #{make_dense.1} parent=5 // pred_fallthru
      _
    %p582 = scmp.le.s32.totalorder 2, %s12
    // Predicated region
    $region45: #{make_dense.1} parent=5 // pred_check
      %p583 = pneg %p582
    $region46: #{make_dense.1} parent=5 // pred_check_branch
      %585 = sbr.rel (%p583) target = $region48
    $region47: #{make_dense.1} parent=5 // pred_region
      %s586 = ssub.s32 %s12, 2
      // Predicated region
      $region49: #{make_dense.1} parent=47 // pred_check
        %p587 = pneg %p151
      $region50: #{make_dense.1} parent=47 // pred_check_branch
        %589 = sbr.rel (%p587) target = $region52
      $region51: #{make_dense.1} parent=47 // pred_region
        %p590 = scmp.lt.s32.totalorder %s18, 1
        %s591 = scalar_select %p590, %s18, 1
        %s592 = smul.addr %s591, 2
        %s593 = smul.addr %s592, 8
        %s594 = scalar_lea.vmem %s5, %s593
      $region52: #{make_dense.1} parent=47 // pred_fallthru
        _
    $region48: #{make_dense.1} parent=5 // pred_fallthru
      _
  $region6: #{make_dense.1} parent=0 // loop_footer
    %s16 = sadd.s32 1, %s12
  $region7: #{make_dense.1} parent=0 // loop_footer_branch
    %11 = sbr.rel target = $region3
  $region8: #{make_dense.1} parent=0 // loop_exit
    _

</llo_original>
